<compile_context>
chip_gen: v6e
topology: v6e:2x2x1
jax: 0.10.0
libtpu: 0.0.40
codegen_flags: <defaults>
</compile_context>

<pallas_src>
import jax
import jax.numpy as jnp
from jax.experimental import pallas as pl
from jax.experimental.pallas import tpu as pltpu

_MIB = 1024 * 1024


# --------------------------------------------------------------------------- #
# Kernel
# --------------------------------------------------------------------------- #
def vae_fwd_kernel(x_ref, eps_ref,
                   w1_ref, b1_ref, wmv_ref, bmv_ref,
                   w2_ref, b2_ref, wo_ref, bo_ref,
                   muvar_ref, z_ref, xmean_ref):
    S, TB, L = eps_ref.shape
    D_in = x_ref.shape[1]
    mm = w1_ref.dtype          # MXU operand dtype (bf16 perf path or f32 exact path)

    # ---- encoder: hidden layer + fused (mu | logvar) projection -------------
    h = jnp.tanh(
        jnp.dot(x_ref[...].astype(mm), w1_ref[...],
                preferred_element_type=jnp.float32) + b1_ref[...])          # (TB, H) f32
    muvar = (jnp.dot(h.astype(mm), wmv_ref[...],
                     preferred_element_type=jnp.float32) + bmv_ref[...])    # (TB, 2L) f32
    muvar_ref[...] = muvar                       # single store of the fused slab

    mu = muvar[:, :L]                            # (TB, L)
    std = jnp.exp(0.5 * muvar[:, L:])            # (TB, L), f32 on the EUP

    # ---- reparameterization, vectorized over samples: one op + one store ----
    z = mu[None] + std[None] * eps_ref[...]      # (S, TB, L) f32
    z_ref[...] = z

    # ---- decoder: single (S*TB, .) 2-D matmuls == decoder(z.view(S*B, L)) ---
    z2 = z.reshape(S * TB, L)                    # leading-dim collapse (free)
    h2 = jnp.tanh(
        jnp.dot(z2.astype(mm), w2_ref[...],
                preferred_element_type=jnp.float32) + b2_ref[...])          # (S*TB, H)
    xm = (jnp.dot(h2.astype(mm), wo_ref[...],
                  preferred_element_type=jnp.float32) + bo_ref[...])        # (S*TB, D_in)
    xmean_ref[...] = xm.reshape(S, TB, D_in)     # one contiguous store (TB % 8 == 0)


# --------------------------------------------------------------------------- #
# Sizing helpers
# --------------------------------------------------------------------------- #
def _round_up(a, m):
    return ((a + m - 1) // m) * m


def _physical_vmem_bytes():
    try:
        info = pltpu.get_tpu_info()
        for name in ("vmem_capacity_bytes", "vmem_bytes", "vmem_size_bytes"):
            v = getattr(info, name, None)
            if isinstance(v, int) and v > 0:
                return v
    except Exception:
        pass
    return 64 * _MIB            # conservative default: v7x per-TensorCore VMEM


def _estimate_vmem_bytes(tb, S, D_in, H, L, w_bytes):
    """Rough per-grid-step VMEM footprint under default double-buffering."""
    f32 = 4
    # resident weights/biases (constant index_map; pipeline still double-buffers)
    weights = 2 * (w_bytes * (D_in * H + H * 2 * L + L * H + H * D_in)
                   + f32 * (H + 2 * L + H + D_in))
    # pipelined per-step input / output tiles (x2 for double buffering)
    io = 2 * f32 * (tb * D_in + S * tb * L                        # x, eps
                    + tb * 2 * L + S * tb * L + S * tb * D_in)    # muvar, z, x_mean
    # in-kernel intermediates (f32 activations + matmul-operand copies)
    interm = (f32 * (tb * H + S * tb * L + S * tb * H + S * tb * D_in)
              + w_bytes * (tb * D_in + tb * H + S * tb * L + S * tb * H))
    return weights + io + interm


def _pick_tb(S, D_in, H, L, w_bytes, budget_bytes):
    # Prefer the biggest tile that fits (also keeps S*tb large so the decoder's
    # L-contraction matmul has enough rows to feed the MXU).
    for t in (1024, 768, 512, 384, 256, 192, 128, 96, 64, 48, 32, 24, 16, 8):
        if _estimate_vmem_bytes(t, S, D_in, H, L, w_bytes) <= budget_bytes:
            return t
    return 8


# --------------------------------------------------------------------------- #
# Parameters
# --------------------------------------------------------------------------- #
def init_params(key, d_in, hidden, latent):
    ks = jax.random.split(key, 6)
    scale = 0.1

    def w(k, shape):
        return (scale * jax.random.normal(k, shape)).astype(jnp.float32)

    return {
        # encoder
        "w1": w(ks[0], (d_in, hidden)), "b1": jnp.zeros((1, hidden), jnp.float32),
        "wm": w(ks[1], (hidden, latent)), "bm": jnp.zeros((1, latent), jnp.float32),
        "wv": w(ks[2], (hidden, latent)), "bv": jnp.zeros((1, latent), jnp.float32),
        # decoder
        "w2": w(ks[3], (latent, hidden)), "b2": jnp.zeros((1, hidden), jnp.float32),
        "wo": w(ks[4], (hidden, d_in)), "bo": jnp.zeros((1, d_in), jnp.float32),
    }


def prepare_params(params, matmul_dtype=jnp.bfloat16):
    """One-time param prep: fuse the mu/logvar projections and cast the weight
    matrices to the MXU operand dtype (bf16 -> full MXU throughput on v6e/v7x
    and half the weight DMA/VMEM). Biases stay f32."""
    wmv = jnp.concatenate([params["wm"], params["wv"]], axis=1)
    bmv = jnp.concatenate([params["bm"], params["bv"]], axis=1)
    mm = matmul_dtype
    return {
        "w1": params["w1"].astype(mm), "b1": params["b1"].astype(jnp.float32),
        "wmv": wmv.astype(mm),         "bmv": bmv.astype(jnp.float32),
        "w2": params["w2"].astype(mm), "b2": params["b2"].astype(jnp.float32),
        "wo": params["wo"].astype(mm), "bo": params["bo"].astype(jnp.float32),
    }


# --------------------------------------------------------------------------- #
# Wrapper
# --------------------------------------------------------------------------- #
def vae_forward(x, eps, prepared, *, tb=None):
    """x: (B, D_in) f32, eps: (S, B, L) f32, prepared: output of prepare_params.

    Returns (mu, logvar, z, x_mean) -- the sufficient statistics of the
    module's VAEOutput (q_z = Normal(mu, exp(0.5*logvar)), p_xgivenz =
    Normal(x_mean, 1)).
    """
    B, D_in = x.shape
    S, Be, L = eps.shape
    assert Be == B
    H = prepared["w1"].shape[1]
    w_bytes = jnp.dtype(prepared["w1"].dtype).itemsize

    # ---- per-generation VMEM budget -> batch tile ---------------------------
    phys_vmem = _physical_vmem_bytes()
    budget = max(phys_vmem - 16 * _MIB, 16 * _MIB)   # 112 MiB v5e/v6e, 48 MiB v7x
    B8 = _round_up(B, 8)
    if tb is None:
        tb = min(_pick_tb(S, D_in, H, L, w_bytes, budget), B8)
        # keep >= 2 grid steps when the batch allows it (2 TensorCores on v7x)
        if B8 >= 16 and tb >= B8:
            tb = _round_up(B8 // 2, 8)
    tb = max(8, _round_up(tb, 8))
    B_pad = _round_up(B, tb)                         # no single-tile fallback: pad

    if B_pad != B:
        x = jnp.pad(x, ((0, B_pad - B), (0, 0)))
        eps = jnp.pad(eps, ((0, 0), (0, B_pad - B), (0, 0)))
    grid = (B_pad // tb,)

    const2 = lambda i: (0, 0)                        # weights stay VMEM-resident
    in_specs = [
        pl.BlockSpec((tb, D_in), lambda i: (i, 0)),        # x
        pl.BlockSpec((S, tb, L), lambda i: (0, i, 0)),     # eps
        pl.BlockSpec((D_in, H), const2),                   # w1
        pl.BlockSpec((1, H), const2),                      # b1
        pl.BlockSpec((H, 2 * L), const2),                  # wm|wv fused
        pl.BlockSpec((1, 2 * L), const2),                  # bm|bv fused
        pl.BlockSpec((L, H), const2),                      # w2
        pl.BlockSpec((1, H), const2),                      # b2
        pl.BlockSpec((H, D_in), const2),                   # wo
        pl.BlockSpec((1, D_in), const2),                   # bo
    ]
    out_specs = (
        pl.BlockSpec((tb, 2 * L), lambda i: (i, 0)),       # [mu | logvar]
        pl.BlockSpec((S, tb, L), lambda i: (0, i, 0)),     # z
        pl.BlockSpec((S, tb, D_in), lambda i: (0, i, 0)),  # x_mean
    )
    out_shape = (
        jax.ShapeDtypeStruct((B_pad, 2 * L), jnp.float32),
        jax.ShapeDtypeStruct((S, B_pad, L), jnp.float32),
        jax.ShapeDtypeStruct((S, B_pad, D_in), jnp.float32),
    )

    fn = pl.pallas_call(
        vae_fwd_kernel,
        out_shape=out_shape,
        grid=grid,
        in_specs=in_specs,
        out_specs=out_specs,
        compiler_params=pltpu.CompilerParams(
            dimension_semantics=("parallel",),
            vmem_limit_bytes=int(budget),
        ),
    )
    muvar, z, x_mean = fn(
        x, eps,
        prepared["w1"], prepared["b1"],
        prepared["wmv"], prepared["bmv"],
        prepared["w2"], prepared["b2"],
        prepared["wo"], prepared["bo"],
    )
    mu = muvar[:B, :L]
    logvar = muvar[:B, L:]
    return mu, logvar, z[:, :B, :], x_mean[:, :B, :]


# --------------------------------------------------------------------------- #
# Pure-JAX reference (for correctness checks)
# --------------------------------------------------------------------------- #
def reference_forward(x, eps, p, matmul_dtype=jnp.float32):
    mm = matmul_dtype

    def dot(a, w):
        return jnp.dot(a.astype(mm), w.astype(mm), preferred_element_type=jnp.float32)

    h = jnp.tanh(dot(x, p["w1"]) + p["b1"])
    mu = dot(h, p["wm"]) + p["bm"]
    logvar = dot(h, p["wv"]) + p["bv"]
    std = jnp.exp(0.5 * logvar)
    z = mu[None] + std[None] * eps
    S, B, L = z.shape
    z2 = z.reshape(S * B, L)
    h2 = jnp.tanh(dot(z2, p["w2"]) + p["b2"])
    xm = (dot(h2, p["wo"]) + p["bo"]).reshape(S, B, -1)
    return mu, logvar, z, xm


# --------------------------------------------------------------------------- #
# Demo / self-check
# --------------------------------------------------------------------------- #
if __name__ == "__main__":
    B, D_IN, HIDDEN, LATENT, S = 16, 32, 64, 16, 2

    key = jax.random.PRNGKey(0)
    k_x, k_eps, k_p = jax.random.split(key, 3)
    x = jax.random.normal(k_x, (B, D_IN), dtype=jnp.float32)
    eps = jax.random.normal(k_eps, (S, B, LATENT), dtype=jnp.float32)
    raw = init_params(k_p, D_IN, HIDDEN, LATENT)

    # ---- exact f32-MXU path (matches the PyTorch module's numerics) ---------
    p_f32 = prepare_params(raw, matmul_dtype=jnp.float32)
    out_f32 = jax.block_until_ready(vae_forward(x, eps, p_f32))
    ref_f32 = reference_forward(x, eps, raw, matmul_dtype=jnp.float32)
    for got, want in zip(out_f32, ref_f32):
        assert got.shape == want.shape and got.dtype == want.dtype
        assert float(jnp.max(jnp.abs(got - want))) < 1e-4

    # ---- bf16-MXU-operand perf path (v6e/v7x lever; f32 accumulation) -------
    p_bf16 = prepare_params(raw, matmul_dtype=jnp.bfloat16)
    out_bf16 = jax.block_until_ready(vae_forward(x, eps, p_bf16))
    ref_bf16 = reference_forward(x, eps, raw, matmul_dtype=jnp.bfloat16)
    for got, want in zip(out_bf16, ref_bf16):
        assert got.shape == want.shape
        assert float(jnp.max(jnp.abs(got - want))) < 1e-2
    for got, want in zip(out_bf16, ref_f32):   # loose sanity vs exact math
        assert float(jnp.max(jnp.abs(got - want))) < 1e-1

    print("KERNEL_OK")
</pallas_src>

<mosaic_0001>
module attributes {stable_mosaic.version = 11 : i64} {
  func.func @vae_fwd_kernel(%arg0: i32, %arg1: memref<8x32xf32, #tpu.memory_space<vmem>>, %arg2: memref<2x8x16xf32, #tpu.memory_space<vmem>>, %arg3: memref<32x64xf32, #tpu.memory_space<vmem>>, %arg4: memref<1x64xf32, #tpu.memory_space<vmem>>, %arg5: memref<64x32xf32, #tpu.memory_space<vmem>>, %arg6: memref<1x32xf32, #tpu.memory_space<vmem>>, %arg7: memref<16x64xf32, #tpu.memory_space<vmem>>, %arg8: memref<1x64xf32, #tpu.memory_space<vmem>>, %arg9: memref<64x32xf32, #tpu.memory_space<vmem>>, %arg10: memref<1x32xf32, #tpu.memory_space<vmem>>, %arg11: memref<8x32xf32, #tpu.memory_space<vmem>>, %arg12: memref<2x8x16xf32, #tpu.memory_space<vmem>>, %arg13: memref<2x8x32xf32, #tpu.memory_space<vmem>>) attributes {dimension_semantics = [#tpu.dimension_semantics<parallel>], iteration_bounds = array<i64: 2>, scalar_prefetch = 0 : i64, scratch_operands = 0 : i64, tpu.core_type = #tpu.core_type<tc>, window_params = [{transform_indices = @transform_0, window_bounds = array<i64: 8, 32>}, {transform_indices = @transform_1, window_bounds = array<i64: 2, 8, 16>}, {pipeline_mode = #tpu.pipeline_mode<synchronous>, transform_indices = @transform_2, window_bounds = array<i64: 32, 64>}, {pipeline_mode = #tpu.pipeline_mode<synchronous>, transform_indices = @transform_3, window_bounds = array<i64: 1, 64>}, {pipeline_mode = #tpu.pipeline_mode<synchronous>, transform_indices = @transform_4, window_bounds = array<i64: 64, 32>}, {pipeline_mode = #tpu.pipeline_mode<synchronous>, transform_indices = @transform_5, window_bounds = array<i64: 1, 32>}, {pipeline_mode = #tpu.pipeline_mode<synchronous>, transform_indices = @transform_6, window_bounds = array<i64: 16, 64>}, {pipeline_mode = #tpu.pipeline_mode<synchronous>, transform_indices = @transform_7, window_bounds = array<i64: 1, 64>}, {pipeline_mode = #tpu.pipeline_mode<synchronous>, transform_indices = @transform_8, window_bounds = array<i64: 64, 32>}, {pipeline_mode = #tpu.pipeline_mode<synchronous>, transform_indices = @transform_9, window_bounds = array<i64: 1, 32>}, {transform_indices = @transform_10, window_bounds = array<i64: 8, 32>}, {transform_indices = @transform_11, window_bounds = array<i64: 2, 8, 16>}, {transform_indices = @transform_12, window_bounds = array<i64: 2, 8, 32>}]} {
    %c0 = arith.constant 0 : index
    %c0_0 = arith.constant 0 : index
    %0 = vector.load %arg1[%c0, %c0_0] : memref<8x32xf32, #tpu.memory_space<vmem>>, vector<8x32xf32>
    %c0_1 = arith.constant 0 : index
    %c0_2 = arith.constant 0 : index
    %1 = vector.load %arg3[%c0_1, %c0_2] : memref<32x64xf32, #tpu.memory_space<vmem>>, vector<32x64xf32>
    %cst = arith.constant dense<0.000000e+00> : vector<8x64xf32>
    %2 = tpu.matmul %0, %1, %cst {dimension_numbers = #tpu.dot_dimension_numbers<[1], [0], [0], [1], [0, 0, 1, 1], [], []>} : vector<8x32xf32>, vector<32x64xf32>, vector<8x64xf32> -> vector<8x64xf32>
    %c0_3 = arith.constant 0 : index
    %c0_4 = arith.constant 0 : index
    %3 = vector.load %arg4[%c0_3, %c0_4] : memref<1x64xf32, #tpu.memory_space<vmem>>, vector<1x64xf32>
    %4 = vector.broadcast %3 : vector<1x64xf32> to vector<8x64xf32>
    %5 = arith.addf %2, %4 : vector<8x64xf32>
    %6 = math.tanh %5 : vector<8x64xf32>
    %c0_5 = arith.constant 0 : index
    %c0_6 = arith.constant 0 : index
    %7 = vector.load %arg5[%c0_5, %c0_6] : memref<64x32xf32, #tpu.memory_space<vmem>>, vector<64x32xf32>
    %cst_7 = arith.constant dense<0.000000e+00> : vector<8x32xf32>
    %8 = tpu.matmul %6, %7, %cst_7 {dimension_numbers = #tpu.dot_dimension_numbers<[1], [0], [0], [1], [0, 0, 1, 1], [], []>} : vector<8x64xf32>, vector<64x32xf32>, vector<8x32xf32> -> vector<8x32xf32>
    %c0_8 = arith.constant 0 : index
    %c0_9 = arith.constant 0 : index
    %9 = vector.load %arg6[%c0_8, %c0_9] : memref<1x32xf32, #tpu.memory_space<vmem>>, vector<1x32xf32>
    %10 = vector.broadcast %9 : vector<1x32xf32> to vector<8x32xf32>
    %11 = arith.addf %8, %10 : vector<8x32xf32>
    %c0_10 = arith.constant 0 : index
    %c0_11 = arith.constant 0 : index
    %12 = vector.load %arg11[%c0_10, %c0_11] : memref<8x32xf32, #tpu.memory_space<vmem>>, vector<8x32xf32>
    tpu.vector_store %arg11[%c0_10, %c0_11], %11 {strides = array<i32>} : memref<8x32xf32, #tpu.memory_space<vmem>>, vector<8x32xf32>,
    %13 = vector.extract_strided_slice %11 {offsets = [0, 0], sizes = [8, 16], strides = [1, 1]} : vector<8x32xf32> to vector<8x16xf32>
    %14 = vector.extract_strided_slice %11 {offsets = [0, 16], sizes = [8, 16], strides = [1, 1]} : vector<8x32xf32> to vector<8x16xf32>
    %cst_12 = arith.constant 5.000000e-01 : f32
    %15 = vector.broadcast %cst_12 : f32 to vector<8x16xf32>
    %16 = arith.mulf %15, %14 : vector<8x16xf32>
    %17 = math.exp %16 : vector<8x16xf32>
    %18 = vector.shape_cast %13 : vector<8x16xf32> to vector<1x8x16xf32>
    %19 = vector.shape_cast %17 : vector<8x16xf32> to vector<1x8x16xf32>
    %c0_13 = arith.constant 0 : index
    %c0_14 = arith.constant 0 : index
    %c0_15 = arith.constant 0 : index
    %20 = vector.load %arg2[%c0_13, %c0_14, %c0_15] : memref<2x8x16xf32, #tpu.memory_space<vmem>>, vector<2x8x16xf32>
    %21 = vector.broadcast %19 : vector<1x8x16xf32> to vector<2x8x16xf32>
    %22 = arith.mulf %21, %20 : vector<2x8x16xf32>
    %23 = vector.broadcast %18 : vector<1x8x16xf32> to vector<2x8x16xf32>
    %24 = arith.addf %23, %22 : vector<2x8x16xf32>
    %c0_16 = arith.constant 0 : index
    %c0_17 = arith.constant 0 : index
    %c0_18 = arith.constant 0 : index
    %25 = vector.load %arg12[%c0_16, %c0_17, %c0_18] : memref<2x8x16xf32, #tpu.memory_space<vmem>>, vector<2x8x16xf32>
    tpu.vector_store %arg12[%c0_16, %c0_17, %c0_18], %24 {strides = array<i32>} : memref<2x8x16xf32, #tpu.memory_space<vmem>>, vector<2x8x16xf32>,
    %26 = vector.shape_cast %24 : vector<2x8x16xf32> to vector<16x16xf32>
    %c0_19 = arith.constant 0 : index
    %c0_20 = arith.constant 0 : index
    %27 = vector.load %arg7[%c0_19, %c0_20] : memref<16x64xf32, #tpu.memory_space<vmem>>, vector<16x64xf32>
    %cst_21 = arith.constant dense<0.000000e+00> : vector<16x64xf32>
    %28 = tpu.matmul %26, %27, %cst_21 {dimension_numbers = #tpu.dot_dimension_numbers<[1], [0], [0], [1], [0, 0, 1, 1], [], []>} : vector<16x16xf32>, vector<16x64xf32>, vector<16x64xf32> -> vector<16x64xf32>
    %c0_22 = arith.constant 0 : index
    %c0_23 = arith.constant 0 : index
    %29 = vector.load %arg8[%c0_22, %c0_23] : memref<1x64xf32, #tpu.memory_space<vmem>>, vector<1x64xf32>
    %30 = vector.broadcast %29 : vector<1x64xf32> to vector<16x64xf32>
    %31 = arith.addf %28, %30 : vector<16x64xf32>
    %32 = math.tanh %31 : vector<16x64xf32>
    %c0_24 = arith.constant 0 : index
    %c0_25 = arith.constant 0 : index
    %33 = vector.load %arg9[%c0_24, %c0_25] : memref<64x32xf32, #tpu.memory_space<vmem>>, vector<64x32xf32>
    %cst_26 = arith.constant dense<0.000000e+00> : vector<16x32xf32>
    %34 = tpu.matmul %32, %33, %cst_26 {dimension_numbers = #tpu.dot_dimension_numbers<[1], [0], [0], [1], [0, 0, 1, 1], [], []>} : vector<16x64xf32>, vector<64x32xf32>, vector<16x32xf32> -> vector<16x32xf32>
    %c0_27 = arith.constant 0 : index
    %c0_28 = arith.constant 0 : index
    %35 = vector.load %arg10[%c0_27, %c0_28] : memref<1x32xf32, #tpu.memory_space<vmem>>, vector<1x32xf32>
    %36 = vector.broadcast %35 : vector<1x32xf32> to vector<16x32xf32>
    %37 = arith.addf %34, %36 : vector<16x32xf32>
    %38 = vector.shape_cast %37 : vector<16x32xf32> to vector<2x8x32xf32>
    %c0_29 = arith.constant 0 : index
    %c0_30 = arith.constant 0 : index
    %c0_31 = arith.constant 0 : index
    %39 = vector.load %arg13[%c0_29, %c0_30, %c0_31] : memref<2x8x32xf32, #tpu.memory_space<vmem>>, vector<2x8x32xf32>
    tpu.vector_store %arg13[%c0_29, %c0_30, %c0_31], %38 {strides = array<i32>} : memref<2x8x32xf32, #tpu.memory_space<vmem>>, vector<2x8x32xf32>,
    return
  }
  func.func @transform_0(%arg0: i32) -> (i32, i32) {
    %c0_i32 = arith.constant 0 : i32
    %c0_i32_0 = arith.constant 0 : i32
    return %arg0, %c0_i32 : i32, i32
  }
  func.func @transform_1(%arg0: i32) -> (i32, i32, i32) {
    %c0_i32 = arith.constant 0 : i32
    %c0_i32_0 = arith.constant 0 : i32
    %c0_i32_1 = arith.constant 0 : i32
    return %c0_i32, %arg0, %c0_i32_0 : i32, i32, i32
  }
  func.func @transform_2(%arg0: i32) -> (i32, i32) {
    %c0_i32 = arith.constant 0 : i32
    %c0_i32_0 = arith.constant 0 : i32
    %c0_i32_1 = arith.constant 0 : i32
    return %c0_i32, %c0_i32_0 : i32, i32
  }
  func.func @transform_3(%arg0: i32) -> (i32, i32) {
    %c0_i32 = arith.constant 0 : i32
    %c0_i32_0 = arith.constant 0 : i32
    %c0_i32_1 = arith.constant 0 : i32
    return %c0_i32, %c0_i32_0 : i32, i32
  }
  func.func @transform_4(%arg0: i32) -> (i32, i32) {
    %c0_i32 = arith.constant 0 : i32
    %c0_i32_0 = arith.constant 0 : i32
    %c0_i32_1 = arith.constant 0 : i32
    return %c0_i32, %c0_i32_0 : i32, i32
  }
  func.func @transform_5(%arg0: i32) -> (i32, i32) {
    %c0_i32 = arith.constant 0 : i32
    %c0_i32_0 = arith.constant 0 : i32
    %c0_i32_1 = arith.constant 0 : i32
    return %c0_i32, %c0_i32_0 : i32, i32
  }
  func.func @transform_6(%arg0: i32) -> (i32, i32) {
    %c0_i32 = arith.constant 0 : i32
    %c0_i32_0 = arith.constant 0 : i32
    %c0_i32_1 = arith.constant 0 : i32
    return %c0_i32, %c0_i32_0 : i32, i32
  }
  func.func @transform_7(%arg0: i32) -> (i32, i32) {
    %c0_i32 = arith.constant 0 : i32
    %c0_i32_0 = arith.constant 0 : i32
    %c0_i32_1 = arith.constant 0 : i32
    return %c0_i32, %c0_i32_0 : i32, i32
  }
  func.func @transform_8(%arg0: i32) -> (i32, i32) {
    %c0_i32 = arith.constant 0 : i32
    %c0_i32_0 = arith.constant 0 : i32
    %c0_i32_1 = arith.constant 0 : i32
    return %c0_i32, %c0_i32_0 : i32, i32
  }
  func.func @transform_9(%arg0: i32) -> (i32, i32) {
    %c0_i32 = arith.constant 0 : i32
    %c0_i32_0 = arith.constant 0 : i32
    %c0_i32_1 = arith.constant 0 : i32
    return %c0_i32, %c0_i32_0 : i32, i32
  }
  func.func @transform_10(%arg0: i32) -> (i32, i32) {
    %c0_i32 = arith.constant 0 : i32
    %c0_i32_0 = arith.constant 0 : i32
    return %arg0, %c0_i32 : i32, i32
  }
  func.func @transform_11(%arg0: i32) -> (i32, i32, i32) {
    %c0_i32 = arith.constant 0 : i32
    %c0_i32_0 = arith.constant 0 : i32
    %c0_i32_1 = arith.constant 0 : i32
    return %c0_i32, %arg0, %c0_i32_0 : i32, i32, i32
  }
  func.func @transform_12(%arg0: i32) -> (i32, i32, i32) {
    %c0_i32 = arith.constant 0 : i32
    %c0_i32_0 = arith.constant 0 : i32
    %c0_i32_1 = arith.constant 0 : i32
    return %c0_i32, %arg0, %c0_i32_0 : i32, i32, i32
  }
}

</mosaic_0001>

<llo_original>
// kernel: tpu_custom_call.1
$region0: #{tpu_custom_call.1}
  #allocation0 [shape = 'u32[]', space=smem, size = 0x4, offset = 0x4, fixed_abs, tag = 'smem constant byte address 0x4 - core index']
  #allocation1 [shape = 'u32[144,128]{1,0:T(1,128)}', space=vmem, size = 0x12000, scoped, tag = 'internal scratch']
  %s0 = inlined_call_operand.vmem [shape: f32[16,32], index: 0, kind: input, shape index: {}]
  %s1 = inlined_call_operand.vmem [shape: f32[2,16,16], index: 1, kind: input, shape index: {}]
  %s2 = inlined_call_operand.vmem [shape: f32[32,64], index: 2, kind: input, shape index: {}]
  %s3 = inlined_call_operand.vmem [shape: f32[1,64], index: 3, kind: input, shape index: {}]
  %s4 = inlined_call_operand.vmem [shape: f32[64,32], index: 4, kind: input, shape index: {}]
  %s5 = inlined_call_operand.vmem [shape: f32[1,32], index: 5, kind: input, shape index: {}]
  %s6 = inlined_call_operand.vmem [shape: f32[16,64], index: 6, kind: input, shape index: {}]
  %s7 = inlined_call_operand.vmem [shape: f32[1,64], index: 7, kind: input, shape index: {}]
  %s8 = inlined_call_operand.vmem [shape: f32[64,32], index: 8, kind: input, shape index: {}]
  %s9 = inlined_call_operand.vmem [shape: f32[1,32], index: 9, kind: input, shape index: {}]
  %s10 = inlined_call_operand.hbm [shape: f32[16,32], index: 10, kind: output, shape index: {0}]
  %s11 = inlined_call_operand.hbm [shape: f32[2,16,16], index: 11, kind: output, shape index: {1}]
  %s12 = inlined_call_operand.hbm [shape: f32[2,16,32], index: 12, kind: output, shape index: {2}]
  %13 = xla_tuple %s10, %s11, %s12
  %s14 = sld [smem:[#allocation0]]
  $region127: #{tpu_custom_call.1} parent=0
    _
  %s16 = ssub.s32 1, %s14
  %s17 = scalar_select 0, %s16, %s14
  $region1: #{tpu_custom_call.1} parent=0
    #allocation2 [shape = 'u8[16384]{0}', space=vmem, size = 0x4000, scoped, tag = 'input window, operand 1']
    #allocation3 [shape = 'u8[8192]{0}', space=vmem, size = 0x2000, scoped, tag = 'output window, operand 0']
    #allocation4 [shape = 's32[2]{0}', space=sflag, size = 0x8, scoped, tag = 'scoped memory for tpu_custom_call.1']
    #allocation5 [shape = 'u8[16384]{0}', space=vmem, size = 0x4000, scoped, tag = 'output window, operand 1']
    #allocation6 [shape = 's32[2]{0}', space=sflag, size = 0x8, scoped, tag = 'scoped memory for tpu_custom_call.1']
    #allocation7 [shape = 'u8[16384]{0}', space=vmem, size = 0x4000, scoped, tag = 'output window, operand 2']
    %18 = vsyncpa [#allocation4], 0
    %s19 = scalar_lea.sflag [#allocation4], 1
    %20 = vsyncpa %s19, 0
    %21 = vsyncpa [#allocation6], 0
    %s22 = scalar_lea.sflag [#allocation6], 1
    %23 = vsyncpa %s22, 0
    loop: start=0, step=1, limit=4
    $region2: #{tpu_custom_call.1} parent=1 // loop_pre_header
      _
    $region3: #{tpu_custom_call.1} parent=1 // loop_header
      %s25 = sphi 0, %s29
      %p26 = scmp.ge.s32.totalorder %s25, 4
      %s35 = sphi 0, %s37
      %s38 = sphi 0, %s35
      %s39 = sphi 0, %s38
      %s55 = sphi 0, %s39
      %s61 = sphi 0, %s63
      %s64 = sphi 0, %s61
      %s65 = sphi 0, %s64
      %s81 = sphi 0, %s65
      %s85 = sphi 0, %s85
      %s87 = sphi 0, %s85
      %s88 = sphi 0, %s87
      %s102 = sphi 0, %s88
      %s106 = sphi 0, %s106
      %s108 = sphi 0, %s106
      %s109 = sphi 0, %s108
      %s123 = sphi 0, %s109
      %s127 = sphi 0, %s127
      %s129 = sphi 0, %s127
      %s130 = sphi 0, %s129
      %s144 = sphi 0, %s130
      %s148 = sphi 0, %s148
      %s150 = sphi 0, %s148
      %s151 = sphi 0, %s150
      %s165 = sphi 0, %s151
      %s169 = sphi 0, %s169
      %s171 = sphi 0, %s169
      %s172 = sphi 0, %s171
      %s186 = sphi 0, %s172
      %s190 = sphi 0, %s190
      %s192 = sphi 0, %s190
      %s193 = sphi 0, %s192
      %s207 = sphi 0, %s193
      %s211 = sphi 0, %s211
      %s213 = sphi 0, %s211
      %s214 = sphi 0, %s213
      %s228 = sphi 0, %s214
      %s232 = sphi 0, %s232
      %s234 = sphi 0, %s232
      %s235 = sphi 0, %s234
      %s249 = sphi 0, %s235
      %s255 = sphi 0, %s257
      %s258 = sphi 0, %s255
      %s259 = sphi 0, %s258
      %s275 = sphi 0, %s259
      %s281 = sphi 0, %s283
      %s284 = sphi 0, %s281
      %s285 = sphi 0, %s284
      %s301 = sphi 0, %s285
      %s307 = sphi 0, %s309
      %s310 = sphi 0, %s307
      %s311 = sphi 0, %s310
      %s327 = sphi 0, %s311
    $region4: #{tpu_custom_call.1} parent=1 // loop_header_branch
      %28 = sbr.rel (%p26) target = $region8
    $region5: #{tpu_custom_call.1} parent=1 // loop_body
      %s30 = ssub.s32 %s25, 1
      %s31 = ssub.s32 %s25, 2
      %s32 = sadd.s32 %s25, 1
      %s33 = ssub.s32 %s25, %s32
      %p34 = scmp.eq.s32.totalorder %s33, 0
      %s36 = sadd.s32 %s35, 1
      %s37 = scalar_select %p34, %s35, %s36
      %p40 = pneg %p34
      %p41 = scmp.eq.s32.totalorder %s25, 1
      %p42 = por %p40, %p41
      %p43 = scmp.ne.s32.totalorder %s35, %s38
      %p44 = scmp.eq.s32.totalorder %s25, 0
      %p45 = por %p43, %p44
      %p46 = scmp.ne.s32.totalorder %s35, %s38
      %p47 = scmp.eq.s32.totalorder %s30, 1
      %p48 = por %p46, %p47
      %p49 = scmp.ne.s32.totalorder %s38, %s39
      %p50 = scmp.eq.s32.totalorder %s30, 0
      %p51 = por %p49, %p50
      %p52 = scmp.ne.s32.totalorder %s38, %s39
      %p53 = scmp.eq.s32.totalorder %s31, 1
      %p54 = por %p52, %p53
      %p56 = scmp.ne.s32.totalorder %s39, %s55
      %p57 = scmp.eq.s32.totalorder %s31, 0
      %p58 = por %p56, %p57
      %s59 = ssub.s32 %s25, %s32
      %p60 = scmp.eq.s32.totalorder %s59, 0
      %s62 = sadd.s32 %s61, 1
      %s63 = scalar_select %p60, %s61, %s62
      %p66 = pneg %p60
      %p67 = scmp.eq.s32.totalorder %s25, 1
      %p68 = por %p66, %p67
      %p69 = scmp.ne.s32.totalorder %s61, %s64
      %p70 = scmp.eq.s32.totalorder %s25, 0
      %p71 = por %p69, %p70
      %p72 = scmp.ne.s32.totalorder %s61, %s64
      %p73 = scmp.eq.s32.totalorder %s30, 1
      %p74 = por %p72, %p73
      %p75 = scmp.ne.s32.totalorder %s64, %s65
      %p76 = scmp.eq.s32.totalorder %s30, 0
      %p77 = por %p75, %p76
      %p78 = scmp.ne.s32.totalorder %s64, %s65
      %p79 = scmp.eq.s32.totalorder %s31, 1
      %p80 = por %p78, %p79
      %p82 = scmp.ne.s32.totalorder %s65, %s81
      %p83 = scmp.eq.s32.totalorder %s31, 0
      %p84 = por %p82, %p83
      %s86 = sadd.s32 %s85, 1
      %p89 = scmp.eq.s32.totalorder %s25, 1
      %p90 = scmp.ne.s32.totalorder %s85, %s87
      %p91 = scmp.eq.s32.totalorder %s25, 0
      %p92 = por %p90, %p91
      %p93 = scmp.ne.s32.totalorder %s85, %s87
      %p94 = scmp.eq.s32.totalorder %s30, 1
      %p95 = por %p93, %p94
      %p96 = scmp.ne.s32.totalorder %s87, %s88
      %p97 = scmp.eq.s32.totalorder %s30, 0
      %p98 = por %p96, %p97
      %p99 = scmp.ne.s32.totalorder %s87, %s88
      %p100 = scmp.eq.s32.totalorder %s31, 1
      %p101 = por %p99, %p100
      %p103 = scmp.ne.s32.totalorder %s88, %s102
      %p104 = scmp.eq.s32.totalorder %s31, 0
      %p105 = por %p103, %p104
      %s107 = sadd.s32 %s106, 1
      %p110 = scmp.eq.s32.totalorder %s25, 1
      %p111 = scmp.ne.s32.totalorder %s106, %s108
      %p112 = scmp.eq.s32.totalorder %s25, 0
      %p113 = por %p111, %p112
      %p114 = scmp.ne.s32.totalorder %s106, %s108
      %p115 = scmp.eq.s32.totalorder %s30, 1
      %p116 = por %p114, %p115
      %p117 = scmp.ne.s32.totalorder %s108, %s109
      %p118 = scmp.eq.s32.totalorder %s30, 0
      %p119 = por %p117, %p118
      %p120 = scmp.ne.s32.totalorder %s108, %s109
      %p121 = scmp.eq.s32.totalorder %s31, 1
      %p122 = por %p120, %p121
      %p124 = scmp.ne.s32.totalorder %s109, %s123
      %p125 = scmp.eq.s32.totalorder %s31, 0
      %p126 = por %p124, %p125
      %s128 = sadd.s32 %s127, 1
      %p131 = scmp.eq.s32.totalorder %s25, 1
      %p132 = scmp.ne.s32.totalorder %s127, %s129
      %p133 = scmp.eq.s32.totalorder %s25, 0
      %p134 = por %p132, %p133
      %p135 = scmp.ne.s32.totalorder %s127, %s129
      %p136 = scmp.eq.s32.totalorder %s30, 1
      %p137 = por %p135, %p136
      %p138 = scmp.ne.s32.totalorder %s129, %s130
      %p139 = scmp.eq.s32.totalorder %s30, 0
      %p140 = por %p138, %p139
      %p141 = scmp.ne.s32.totalorder %s129, %s130
      %p142 = scmp.eq.s32.totalorder %s31, 1
      %p143 = por %p141, %p142
      %p145 = scmp.ne.s32.totalorder %s130, %s144
      %p146 = scmp.eq.s32.totalorder %s31, 0
      %p147 = por %p145, %p146
      %s149 = sadd.s32 %s148, 1
      %p152 = scmp.eq.s32.totalorder %s25, 1
      %p153 = scmp.ne.s32.totalorder %s148, %s150
      %p154 = scmp.eq.s32.totalorder %s25, 0
      %p155 = por %p153, %p154
      %p156 = scmp.ne.s32.totalorder %s148, %s150
      %p157 = scmp.eq.s32.totalorder %s30, 1
      %p158 = por %p156, %p157
      %p159 = scmp.ne.s32.totalorder %s150, %s151
      %p160 = scmp.eq.s32.totalorder %s30, 0
      %p161 = por %p159, %p160
      %p162 = scmp.ne.s32.totalorder %s150, %s151
      %p163 = scmp.eq.s32.totalorder %s31, 1
      %p164 = por %p162, %p163
      %p166 = scmp.ne.s32.totalorder %s151, %s165
      %p167 = scmp.eq.s32.totalorder %s31, 0
      %p168 = por %p166, %p167
      %s170 = sadd.s32 %s169, 1
      %p173 = scmp.eq.s32.totalorder %s25, 1
      %p174 = scmp.ne.s32.totalorder %s169, %s171
      %p175 = scmp.eq.s32.totalorder %s25, 0
      %p176 = por %p174, %p175
      %p177 = scmp.ne.s32.totalorder %s169, %s171
      %p178 = scmp.eq.s32.totalorder %s30, 1
      %p179 = por %p177, %p178
      %p180 = scmp.ne.s32.totalorder %s171, %s172
      %p181 = scmp.eq.s32.totalorder %s30, 0
      %p182 = por %p180, %p181
      %p183 = scmp.ne.s32.totalorder %s171, %s172
      %p184 = scmp.eq.s32.totalorder %s31, 1
      %p185 = por %p183, %p184
      %p187 = scmp.ne.s32.totalorder %s172, %s186
      %p188 = scmp.eq.s32.totalorder %s31, 0
      %p189 = por %p187, %p188
      %s191 = sadd.s32 %s190, 1
      %p194 = scmp.eq.s32.totalorder %s25, 1
      %p195 = scmp.ne.s32.totalorder %s190, %s192
      %p196 = scmp.eq.s32.totalorder %s25, 0
      %p197 = por %p195, %p196
      %p198 = scmp.ne.s32.totalorder %s190, %s192
      %p199 = scmp.eq.s32.totalorder %s30, 1
      %p200 = por %p198, %p199
      %p201 = scmp.ne.s32.totalorder %s192, %s193
      %p202 = scmp.eq.s32.totalorder %s30, 0
      %p203 = por %p201, %p202
      %p204 = scmp.ne.s32.totalorder %s192, %s193
      %p205 = scmp.eq.s32.totalorder %s31, 1
      %p206 = por %p204, %p205
      %p208 = scmp.ne.s32.totalorder %s193, %s207
      %p209 = scmp.eq.s32.totalorder %s31, 0
      %p210 = por %p208, %p209
      %s212 = sadd.s32 %s211, 1
      %p215 = scmp.eq.s32.totalorder %s25, 1
      %p216 = scmp.ne.s32.totalorder %s211, %s213
      %p217 = scmp.eq.s32.totalorder %s25, 0
      %p218 = por %p216, %p217
      %p219 = scmp.ne.s32.totalorder %s211, %s213
      %p220 = scmp.eq.s32.totalorder %s30, 1
      %p221 = por %p219, %p220
      %p222 = scmp.ne.s32.totalorder %s213, %s214
      %p223 = scmp.eq.s32.totalorder %s30, 0
      %p224 = por %p222, %p223
      %p225 = scmp.ne.s32.totalorder %s213, %s214
      %p226 = scmp.eq.s32.totalorder %s31, 1
      %p227 = por %p225, %p226
      %p229 = scmp.ne.s32.totalorder %s214, %s228
      %p230 = scmp.eq.s32.totalorder %s31, 0
      %p231 = por %p229, %p230
      %s233 = sadd.s32 %s232, 1
      %p236 = scmp.eq.s32.totalorder %s25, 1
      %p237 = scmp.ne.s32.totalorder %s232, %s234
      %p238 = scmp.eq.s32.totalorder %s25, 0
      %p239 = por %p237, %p238
      %p240 = scmp.ne.s32.totalorder %s232, %s234
      %p241 = scmp.eq.s32.totalorder %s30, 1
      %p242 = por %p240, %p241
      %p243 = scmp.ne.s32.totalorder %s234, %s235
      %p244 = scmp.eq.s32.totalorder %s30, 0
      %p245 = por %p243, %p244
      %p246 = scmp.ne.s32.totalorder %s234, %s235
      %p247 = scmp.eq.s32.totalorder %s31, 1
      %p248 = por %p246, %p247
      %p250 = scmp.ne.s32.totalorder %s235, %s249
      %p251 = scmp.eq.s32.totalorder %s31, 0
      %p252 = por %p250, %p251
      %s253 = ssub.s32 %s25, %s32
      %p254 = scmp.eq.s32.totalorder %s253, 0
      %s256 = sadd.s32 %s255, 1
      %s257 = scalar_select %p254, %s255, %s256
      %p260 = pneg %p254
      %p261 = scmp.eq.s32.totalorder %s25, 1
      %p262 = por %p260, %p261
      %p263 = scmp.ne.s32.totalorder %s255, %s258
      %p264 = scmp.eq.s32.totalorder %s25, 0
      %p265 = por %p263, %p264
      %p266 = scmp.ne.s32.totalorder %s255, %s258
      %p267 = scmp.eq.s32.totalorder %s30, 1
      %p268 = por %p266, %p267
      %p269 = scmp.ne.s32.totalorder %s258, %s259
      %p270 = scmp.eq.s32.totalorder %s30, 0
      %p271 = por %p269, %p270
      %p272 = scmp.ne.s32.totalorder %s258, %s259
      %p273 = scmp.eq.s32.totalorder %s31, 1
      %p274 = por %p272, %p273
      %p276 = scmp.ne.s32.totalorder %s259, %s275
      %p277 = scmp.eq.s32.totalorder %s31, 0
      %p278 = por %p276, %p277
      %s279 = ssub.s32 %s25, %s32
      %p280 = scmp.eq.s32.totalorder %s279, 0
      %s282 = sadd.s32 %s281, 1
      %s283 = scalar_select %p280, %s281, %s282
      %p286 = pneg %p280
      %p287 = scmp.eq.s32.totalorder %s25, 1
      %p288 = por %p286, %p287
      %p289 = scmp.ne.s32.totalorder %s281, %s284
      %p290 = scmp.eq.s32.totalorder %s25, 0
      %p291 = por %p289, %p290
      %p292 = scmp.ne.s32.totalorder %s281, %s284
      %p293 = scmp.eq.s32.totalorder %s30, 1
      %p294 = por %p292, %p293
      %p295 = scmp.ne.s32.totalorder %s284, %s285
      %p296 = scmp.eq.s32.totalorder %s30, 0
      %p297 = por %p295, %p296
      %p298 = scmp.ne.s32.totalorder %s284, %s285
      %p299 = scmp.eq.s32.totalorder %s31, 1
      %p300 = por %p298, %p299
      %p302 = scmp.ne.s32.totalorder %s285, %s301
      %p303 = scmp.eq.s32.totalorder %s31, 0
      %p304 = por %p302, %p303
      %s305 = ssub.s32 %s25, %s32
      %p306 = scmp.eq.s32.totalorder %s305, 0
      %s308 = sadd.s32 %s307, 1
      %s309 = scalar_select %p306, %s307, %s308
      %p312 = pneg %p306
      %p313 = scmp.eq.s32.totalorder %s25, 1
      %p314 = por %p312, %p313
      %p315 = scmp.ne.s32.totalorder %s307, %s310
      %p316 = scmp.eq.s32.totalorder %s25, 0
      %p317 = por %p315, %p316
      %p318 = scmp.ne.s32.totalorder %s307, %s310
      %p319 = scmp.eq.s32.totalorder %s30, 1
      %p320 = por %p318, %p319
      %p321 = scmp.ne.s32.totalorder %s310, %s311
      %p322 = scmp.eq.s32.totalorder %s30, 0
      %p323 = por %p321, %p322
      %p324 = scmp.ne.s32.totalorder %s310, %s311
      %p325 = scmp.eq.s32.totalorder %s31, 1
      %p326 = por %p324, %p325
      %p328 = scmp.ne.s32.totalorder %s311, %s327
      %p329 = scmp.eq.s32.totalorder %s31, 0
      %p330 = por %p328, %p329
      %p331 = scmp.le.s32.totalorder 1, %s25
      %p332 = scmp.lt.s32.totalorder %s25, 3
      %p333 = pnand %p331, %p332
      %p334 = pneg %p333
      // Predicated region
      $region9: #{tpu_custom_call.1} parent=5 // pred_check
        _
      $region10: #{tpu_custom_call.1} parent=5 // pred_check_branch
        %336 = sbr.rel (%p333) target = $region12
      $region11: #{tpu_custom_call.1} parent=5 // pred_region
        %s337 = ssub.s32 %s25, 1
        // Predicated region
        $region13: #{tpu_custom_call.1} parent=11 // pred_check
          %p338 = pneg %p98
        $region14: #{tpu_custom_call.1} parent=11 // pred_check_branch
          %340 = sbr.rel (%p338) target = $region16
        $region15: #{tpu_custom_call.1} parent=11 // pred_region
          _
        $region16: #{tpu_custom_call.1} parent=11 // pred_fallthru
          _
        // Predicated region
        $region17: #{tpu_custom_call.1} parent=11 // pred_check
          %p341 = pneg %p119
        $region18: #{tpu_custom_call.1} parent=11 // pred_check_branch
          %343 = sbr.rel (%p341) target = $region20
        $region19: #{tpu_custom_call.1} parent=11 // pred_region
          _
        $region20: #{tpu_custom_call.1} parent=11 // pred_fallthru
          _
        // Predicated region
        $region21: #{tpu_custom_call.1} parent=11 // pred_check
          %p344 = pneg %p140
        $region22: #{tpu_custom_call.1} parent=11 // pred_check_branch
          %346 = sbr.rel (%p344) target = $region24
        $region23: #{tpu_custom_call.1} parent=11 // pred_region
          _
        $region24: #{tpu_custom_call.1} parent=11 // pred_fallthru
          _
        // Predicated region
        $region25: #{tpu_custom_call.1} parent=11 // pred_check
          %p347 = pneg %p161
        $region26: #{tpu_custom_call.1} parent=11 // pred_check_branch
          %349 = sbr.rel (%p347) target = $region28
        $region27: #{tpu_custom_call.1} parent=11 // pred_region
          _
        $region28: #{tpu_custom_call.1} parent=11 // pred_fallthru
          _
        // Predicated region
        $region29: #{tpu_custom_call.1} parent=11 // pred_check
          %p350 = pneg %p182
        $region30: #{tpu_custom_call.1} parent=11 // pred_check_branch
          %352 = sbr.rel (%p350) target = $region32
        $region31: #{tpu_custom_call.1} parent=11 // pred_region
          _
        $region32: #{tpu_custom_call.1} parent=11 // pred_fallthru
          _
        // Predicated region
        $region33: #{tpu_custom_call.1} parent=11 // pred_check
          %p353 = pneg %p203
        $region34: #{tpu_custom_call.1} parent=11 // pred_check_branch
          %355 = sbr.rel (%p353) target = $region36
        $region35: #{tpu_custom_call.1} parent=11 // pred_region
          _
        $region36: #{tpu_custom_call.1} parent=11 // pred_fallthru
          _
        // Predicated region
        $region37: #{tpu_custom_call.1} parent=11 // pred_check
          %p356 = pneg %p224
        $region38: #{tpu_custom_call.1} parent=11 // pred_check_branch
          %358 = sbr.rel (%p356) target = $region40
        $region39: #{tpu_custom_call.1} parent=11 // pred_region
          _
        $region40: #{tpu_custom_call.1} parent=11 // pred_fallthru
          _
        // Predicated region
        $region41: #{tpu_custom_call.1} parent=11 // pred_check
          %p359 = pneg %p245
        $region42: #{tpu_custom_call.1} parent=11 // pred_check_branch
          %361 = sbr.rel (%p359) target = $region44
        $region43: #{tpu_custom_call.1} parent=11 // pred_region
          _
        $region44: #{tpu_custom_call.1} parent=11 // pred_fallthru
          _
      $region12: #{tpu_custom_call.1} parent=5 // pred_fallthru
        _
      %p362 = scmp.lt.s32.totalorder %s25, 2
      // Predicated region
      $region45: #{tpu_custom_call.1} parent=5 // pred_check
        %p363 = pneg %p362
      $region46: #{tpu_custom_call.1} parent=5 // pred_check_branch
        %365 = sbr.rel (%p363) target = $region48
      $region47: #{tpu_custom_call.1} parent=5 // pred_region
        // Predicated region
        $region49: #{tpu_custom_call.1} parent=47 // pred_check
          %p366 = pneg %p45
        $region50: #{tpu_custom_call.1} parent=47 // pred_check_branch
          %368 = sbr.rel (%p366) target = $region52
        $region51: #{tpu_custom_call.1} parent=47 // pred_region
          %p369 = scmp.lt.s32.totalorder %s25, 1
          %s370 = scalar_select %p369, %s25, 1
          %s371 = smul.addr %s370, 8
          %s372 = scalar_lea.vmem %s0, %s371
        $region52: #{tpu_custom_call.1} parent=47 // pred_fallthru
          _
        // Predicated region
        $region53: #{tpu_custom_call.1} parent=47 // pred_check
          %p373 = pneg %p71
        $region54: #{tpu_custom_call.1} parent=47 // pred_check_branch
          %375 = sbr.rel (%p373) target = $region56
        $region55: #{tpu_custom_call.1} parent=47 // pred_region
          %s376 = sand.u32 %s61, 1
          %s377 = sand.u32 %s61, 1
          %s378 = smul.addr %s377, 16
          %s379 = scalar_lea.vmem [#allocation2], %s378
          %s380 = smul.addr %s25, 8
          %s381 = scalar_lea.vmem %s1, %s380
          // Predicated region
          $region57: #{tpu_custom_call.1} parent=55 // pred_check
            _
          $region58: #{tpu_custom_call.1} parent=55 // pred_check_branch
            %383 = sbr.rel (0) target = $region60
          $region59: #{tpu_custom_call.1} parent=55 // pred_region
            // Predicated region
            $region61: #{tpu_custom_call.1} parent=59 // pred_check
              _
            $region62: #{tpu_custom_call.1} parent=59 // pred_check_branch
              %385 = sbr.rel (0) target = $region64
            $region63: #{tpu_custom_call.1} parent=59 // pred_region
              // Predicated region
              $region76: #{tpu_custom_call.1} parent=63 // pred_check
                _
              $region77: #{tpu_custom_call.1} parent=63 // pred_check_branch
                %403 = sbr.rel (0) target = $region79
              $region78: #{tpu_custom_call.1} parent=63 // pred_region
                loop: start=0, step=1, limit=1
                $region80: #{tpu_custom_call.1} parent=78 // loop_pre_header
                  _
                $region81: #{tpu_custom_call.1} parent=78 // loop_header
                  %s405 = sphi 0, %s409
                  %p406 = scmp.ge.s32.totalorder %s405, 1
                  %s410 = sphi %s381, %s381
                  %s411 = sphi %s379, %s379
                $region82: #{tpu_custom_call.1} parent=78 // loop_header_branch
                  %408 = sbr.rel (%p406) target = $region86
                $region83: #{tpu_custom_call.1} parent=78 // loop_body
                  %v412 = vld [vmem:[%s410] sm:$0xff]
                  %413 = vst [vmem:[%s411] sm:$0xff] %v412
                  %v414 = vld [vmem:[%s410 + $0x10] sm:$0xff]
                  %415 = vst [vmem:[%s411 + $0x8] sm:$0xff] %v414
                $region84: #{tpu_custom_call.1} parent=78 // loop_footer
                  %s409 = sadd.s32 1, %s405
                $region85: #{tpu_custom_call.1} parent=78 // loop_footer_branch
                  %404 = sbr.rel target = $region81
                $region86: #{tpu_custom_call.1} parent=78 // loop_exit
                  _
              $region79: #{tpu_custom_call.1} parent=63 // pred_fallthru
                _
              // Predicated region
              $region87: #{tpu_custom_call.1} parent=63 // pred_check
                _
              $region88: #{tpu_custom_call.1} parent=63 // pred_check_branch
                %417 = sbr.rel target = $region90
              $region89: #{tpu_custom_call.1} parent=63 // pred_region
                _
              $region90: #{tpu_custom_call.1} parent=63 // pred_fallthru
                _
            $region64: #{tpu_custom_call.1} parent=59 // pred_fallthru
              _
            // Predicated region
            $region65: #{tpu_custom_call.1} parent=59 // pred_check
              _
            $region66: #{tpu_custom_call.1} parent=59 // pred_check_branch
              %387 = sbr.rel target = $region68
            $region67: #{tpu_custom_call.1} parent=59 // pred_region
              %s389 = ssub.s32 256, 1
              loop: start=0, step=1, limit=1
              $region69: #{tpu_custom_call.1} parent=67 // loop_pre_header
                _
              $region70: #{tpu_custom_call.1} parent=67 // loop_header
                %s391 = sphi 0, %s395
                %p392 = scmp.ge.s32.totalorder %s391, 1
                %s396 = sphi %s381, %s381
                %s397 = sphi %s379, %s379
              $region71: #{tpu_custom_call.1} parent=67 // loop_header_branch
                %394 = sbr.rel (%p392) target = $region75
              $region72: #{tpu_custom_call.1} parent=67 // loop_body
                %v398 = vld [vmem:[%s396] sm:%s389]
                %399 = vst [vmem:[%s397] sm:%s389] %v398
                %v400 = vld [vmem:[%s396 + $0x10] sm:%s389]
                %401 = vst [vmem:[%s397 + $0x8] sm:%s389] %v400
              $region73: #{tpu_custom_call.1} parent=67 // loop_footer
                %s395 = sadd.s32 1, %s391
              $region74: #{tpu_custom_call.1} parent=67 // loop_footer_branch
                %390 = sbr.rel target = $region70
              $region75: #{tpu_custom_call.1} parent=67 // loop_exit
                _
            $region68: #{tpu_custom_call.1} parent=59 // pred_fallthru
              _
          $region60: #{tpu_custom_call.1} parent=55 // pred_fallthru
            _
          %418 = vnop
        $region56: #{tpu_custom_call.1} parent=47 // pred_fallthru
          _
      $region48: #{tpu_custom_call.1} parent=5 // pred_fallthru
        _
      %p419 = scmp.le.s32.totalorder 1, %s25
      %p420 = scmp.lt.s32.totalorder %s25, 3
      %p421 = pnand %p419, %p420
      %p422 = pneg %p421
      // Predicated region
      $region91: #{tpu_custom_call.1} parent=5 // pred_check
        _
      $region92: #{tpu_custom_call.1} parent=5 // pred_check_branch
        %424 = sbr.rel (%p421) target = $region94
      $region93: #{tpu_custom_call.1} parent=5 // pred_region
        %s425 = ssub.s32 %s25, 1
        %s426 = sand.u32 %s64, 1
        %s427 = sand.u32 %s64, 1
        %s428 = smul.addr %s427, 16
        %s429 = scalar_lea.vmem [#allocation2], %s428
        // Predicated region
        $region95: #{tpu_custom_call.1} parent=93 // pred_check
          %p430 = pneg %p77
        $region96: #{tpu_custom_call.1} parent=93 // pred_check_branch
          %432 = sbr.rel (%p430) target = $region98
        $region97: #{tpu_custom_call.1} parent=93 // pred_region
          _
        $region98: #{tpu_custom_call.1} parent=93 // pred_fallthru
          _
        %p433 = scmp.lt.s32.totalorder %s30, 1
        %s434 = scalar_select %p433, %s30, 1
        %s435 = smul.addr %s434, 8
        %s436 = scalar_lea.vmem %s0, %s435
        %p437 = pneg %p51
        %p438 = pneg %p48
        %s439 = sand.u32 %s64, 1
        %s440 = sand.u32 %s64, 1
        %s441 = smul.addr %s440, 16
        %s442 = scalar_lea.vmem [#allocation2], %s441
        %p443 = pneg %p77
        %p444 = pneg %p74
        %p445 = pneg %p98
        %p446 = pneg %p95
        %p447 = pneg %p119
        %p448 = pneg %p116
        %p449 = pneg %p140
        %p450 = pneg %p137
        %p451 = pneg %p161
        %p452 = pneg %p158
        %p453 = pneg %p182
        %p454 = pneg %p179
        %p455 = pneg %p203
        %p456 = pneg %p200
        %p457 = pneg %p224
        %p458 = pneg %p221
        %p459 = pneg %p245
        %p460 = pneg %p242
        %p461 = pneg %p271
        %p462 = pneg %p268
        %s463 = sand.u32 %s258, 1
        %s464 = scalar_lea.sflag [#allocation4], %s463
        %s465 = sand.u32 %s258, 1
        %s466 = smul.addr %s465, 8
        %s467 = scalar_lea.vmem [#allocation3], %s466
        %p468 = pneg %p297
        %p469 = pneg %p294
        %s470 = sand.u32 %s30, 1
        %s471 = scalar_lea.sflag [#allocation6], %s470
        %s472 = sand.u32 %s284, 1
        %s473 = smul.addr %s472, 16
        %s474 = scalar_lea.vmem [#allocation5], %s473
        %p475 = pneg %p323
        %p476 = pneg %p320
        %s477 = sand.u32 %s30, 1
        %s478 = scalar_lea.sflag [#allocation6], %s477
        %s479 = sand.u32 %s310, 1
        %s480 = smul.addr %s479, 16
        %s481 = scalar_lea.vmem [#allocation7], %s480
        %p482 = scmp.lt.s32.totalorder %s30, 1
        %s483 = scalar_select %p482, %s30, 1
        %s484 = smul.addr %s483, 8
        %s485 = scalar_lea.vmem %s0, %s484
        %v486 = vld [vmem:[%s485] sm:$0xff]
        %v487 = vld [vmem:[%s2] sm:$0xff]
        %v488 = vld [vmem:[%s2 + $0x8] sm:$0xff]
        %v489 = vld [vmem:[%s2 + $0x10] sm:$0xff]
        %v490 = vld [vmem:[%s2 + $0x18] sm:$0xff]
        %v491 = vld [vmem:[%s3] sm:$0x1]
        %v493 = vlaneseq
        %v494 = vshrl.u32 %v493, 7
        %v495 = vsub.s32 0, %v494
        %v496 = vrot.slane %v491, %v495
        %vm498 = vcmask 261120
        %v500 = vsel %vm498, %v486, 0
        %502 = vmatprep.subr.mxu0 0.0
        %503 = vmatpush1.msra.mxu0 0.0
        %504 = vmatprep.subr.mxu0 0.0
        %505 = vmatpush1.msra.mxu0 0.0
        %506 = vmatprep.subr.mxu0 0.0
        %507 = vmatpush1.msra.mxu0 0.0
        %508 = vmatprep.subr.mxu0 0.0
        %509 = vmatpush1.msra.mxu0 0.0
        %510 = vmatprep.subr.mxu0 0.0
        %511 = vmatpush1.msra.mxu0 0.0
        %512 = vmatprep.subr.mxu0 0.0
        %513 = vmatpush1.msra.mxu0 0.0
        %514 = vmatprep.subr.mxu0 0.0
        %515 = vmatpush1.msra.mxu0 0.0
        %516 = vmatprep.subr.mxu0 0.0
        %517 = vmatpush1.msra.mxu0 0.0
        %518 = vmatprep.subr.mxu0 0.0
        %519 = vmatpush1.msra.mxu0 0.0
        %520 = vmatprep.subr.mxu0 0.0
        %521 = vmatpush1.msra.mxu0 0.0
        %522 = vmatprep.subr.mxu0 0.0
        %523 = vmatpush1.msra.mxu0 0.0
        %524 = vmatprep.subr.mxu0 0.0
        %525 = vmatpush1.msra.mxu0 0.0
        %526 = vmatprep.subr.mxu0 0.0
        %527 = vmatpush1.msra.mxu0 %v490
        %528 = vmatprep.subr.mxu0 0.0
        %529 = vmatpush1.msra.mxu0 %v489
        %530 = vmatprep.subr.mxu0 0.0
        %531 = vmatpush1.msra.mxu0 %v488
        %532 = vmatprep.subr.mxu0 0.0
        %533 = vmatpush1.msra.mxu0 %v487
        %534 = vmatprep.subr.mxu0 0.0
        %535 = vmatpush2.msra.mxu0 0.0
        %536 = vmatprep.subr.mxu0 0.0
        %537 = vmatpush2.msra.mxu0 0.0
        %538 = vmatprep.subr.mxu0 0.0
        %539 = vmatpush2.msra.mxu0 0.0
        %540 = vmatprep.subr.mxu0 0.0
        %541 = vmatpush2.msra.mxu0 0.0
        %542 = vmatprep.subr.mxu0 0.0
        %543 = vmatpush2.msra.mxu0 0.0
        %544 = vmatprep.subr.mxu0 0.0
        %545 = vmatpush2.msra.mxu0 0.0
        %546 = vmatprep.subr.mxu0 0.0
        %547 = vmatpush2.msra.mxu0 0.0
        %548 = vmatprep.subr.mxu0 0.0
        %549 = vmatpush2.msra.mxu0 0.0
        %550 = vmatprep.subr.mxu0 0.0
        %551 = vmatpush2.msra.mxu0 0.0
        %552 = vmatprep.subr.mxu0 0.0
        %553 = vmatpush2.msra.mxu0 0.0
        %554 = vmatprep.subr.mxu0 0.0
        %555 = vmatpush2.msra.mxu0 0.0
        %556 = vmatprep.subr.mxu0 0.0
        %557 = vmatpush2.msra.mxu0 0.0
        %558 = vmatprep.subr.mxu0 0.0
        %559 = vmatpush2.msra.mxu0 0.0
        %560 = vmatprep.subr.mxu0 0.0
        %561 = vmatpush2.msra.mxu0 0.0
        %562 = vmatprep.subr.mxu0 0.0
        %563 = vmatpush2.msra.mxu0 0.0
        %564 = vmatprep.subr.mxu0 0.0
        %565 = vmatpush2.msra.mxu0 0.0
        %566 = vmatprep.mubr.f32.mxu0 0.0
        %567 = vmatmul.mubr.f32.gmra.mxu0 %v500
        %v568 = vpop.f32.mrf.mxu0
        %v569 = vadd.f32 %v496, %v568
        %v570 = vpop.f32.mrf.mxu0
        %571 = vdwg.mxu0
        %v572 = vtanh.pop %v569
        %v573 = vld [vmem:[%s4] sm:$0xff]
        %v574 = vld [vmem:[%s4 + $0x8] sm:$0xff]
        %v575 = vld [vmem:[%s4 + $0x10] sm:$0xff]
        %v576 = vld [vmem:[%s4 + $0x18] sm:$0xff]
        %v577 = vld [vmem:[%s4 + $0x20] sm:$0xff]
        %v578 = vld [vmem:[%s4 + $0x28] sm:$0xff]
        %v579 = vld [vmem:[%s4 + $0x30] sm:$0xff]
        %v580 = vld [vmem:[%s4 + $0x38] sm:$0xff]
        %v581 = vld [vmem:[%s5] sm:$0x1]
        %v583 = vlaneseq
        %v584 = vshrl.u32 %v583, 7
        %v585 = vsub.s32 0, %v584
        %v586 = vrot.slane %v581, %v585
        %vm588 = vcmask 523264
        %v590 = vsel %vm588, %v572, 0
        %592 = vmatprep.subr.mxu0 0.0
        %593 = vmatpush1.msra.mxu0 0.0
        %594 = vmatprep.subr.mxu0 0.0
        %595 = vmatpush1.msra.mxu0 0.0
        %596 = vmatprep.subr.mxu0 0.0
        %597 = vmatpush1.msra.mxu0 0.0
        %598 = vmatprep.subr.mxu0 0.0
        %599 = vmatpush1.msra.mxu0 0.0
        %600 = vmatprep.subr.mxu0 0.0
        %601 = vmatpush1.msra.mxu0 0.0
        %602 = vmatprep.subr.mxu0 0.0
        %603 = vmatpush1.msra.mxu0 0.0
        %604 = vmatprep.subr.mxu0 0.0
        %605 = vmatpush1.msra.mxu0 0.0
        %606 = vmatprep.subr.mxu0 0.0
        %607 = vmatpush1.msra.mxu0 0.0
        %608 = vmatprep.subr.mxu0 0.0
        %609 = vmatpush1.msra.mxu0 %v580
        %610 = vmatprep.subr.mxu0 0.0
        %611 = vmatpush1.msra.mxu0 %v579
        %612 = vmatprep.subr.mxu0 0.0
        %613 = vmatpush1.msra.mxu0 %v578
        %614 = vmatprep.subr.mxu0 0.0
        %615 = vmatpush1.msra.mxu0 %v577
        %616 = vmatprep.subr.mxu0 0.0
        %617 = vmatpush1.msra.mxu0 %v576
        %618 = vmatprep.subr.mxu0 0.0
        %619 = vmatpush1.msra.mxu0 %v575
        %620 = vmatprep.subr.mxu0 0.0
        %621 = vmatpush1.msra.mxu0 %v574
        %622 = vmatprep.subr.mxu0 0.0
        %623 = vmatpush1.msra.mxu0 %v573
        %624 = vmatprep.subr.mxu0 0.0
        %625 = vmatpush2.msra.mxu0 0.0
        %626 = vmatprep.subr.mxu0 0.0
        %627 = vmatpush2.msra.mxu0 0.0
        %628 = vmatprep.subr.mxu0 0.0
        %629 = vmatpush2.msra.mxu0 0.0
        %630 = vmatprep.subr.mxu0 0.0
        %631 = vmatpush2.msra.mxu0 0.0
        %632 = vmatprep.subr.mxu0 0.0
        %633 = vmatpush2.msra.mxu0 0.0
        %634 = vmatprep.subr.mxu0 0.0
        %635 = vmatpush2.msra.mxu0 0.0
        %636 = vmatprep.subr.mxu0 0.0
        %637 = vmatpush2.msra.mxu0 0.0
        %638 = vmatprep.subr.mxu0 0.0
        %639 = vmatpush2.msra.mxu0 0.0
        %640 = vmatprep.subr.mxu0 0.0
        %641 = vmatpush2.msra.mxu0 0.0
        %642 = vmatprep.subr.mxu0 0.0
        %643 = vmatpush2.msra.mxu0 0.0
        %644 = vmatprep.subr.mxu0 0.0
        %645 = vmatpush2.msra.mxu0 0.0
        %646 = vmatprep.subr.mxu0 0.0
        %647 = vmatpush2.msra.mxu0 0.0
        %648 = vmatprep.subr.mxu0 0.0
        %649 = vmatpush2.msra.mxu0 0.0
        %650 = vmatprep.subr.mxu0 0.0
        %651 = vmatpush2.msra.mxu0 0.0
        %652 = vmatprep.subr.mxu0 0.0
        %653 = vmatpush2.msra.mxu0 0.0
        %654 = vmatprep.subr.mxu0 0.0
        %655 = vmatpush2.msra.mxu0 0.0
        %656 = vmatprep.mubr.f32.mxu0 0.0
        %657 = vmatmul.mubr.f32.gmra.mxu0 %v590
        %v658 = vpop.f32.mrf.mxu0
        %v659 = vadd.f32 %v586, %v658
        %v660 = vpop.f32.mrf.mxu0
        %661 = vdwg.mxu0
        %662 = vst.msk [vmem:[%s467] sm:$0xff] %vm498, %v659
        %v663 = vmul.f32 %v659, 0.5
        %v664 = vmul.f32 %v663, 1.442695
        %v665 = vpow.pop %v664
        %v666 = vld [vmem:[%s429] sm:$0xff]
        %v667 = vld [vmem:[%s429 + $0x8] sm:$0xff]
        %670 = vrot.lane.b32.xlu0 %v666, 16
        %v671 = vpop.permute.xlu0 %670
        %672 = vrot.lane.b32.xlu0 %v667, 16
        %v673 = vpop.permute.xlu0 %672
        %v676 = vmul.f32 %v665, %v671
        %v677 = vmul.f32 %v665, %v673
        %680 = vrot.lane.b32.xlu0 %v676, 112
        %v681 = vpop.permute.xlu0 %680
        %682 = vrot.lane.b32.xlu0 %v677, 112
        %v683 = vpop.permute.xlu0 %682
        %v686 = vadd.f32 %v659, %v681
        %v687 = vadd.f32 %v659, %v683
        %vm688 = vcmask 130048
        %689 = vst.msk [vmem:[%s474] sm:$0xff] %vm688, %v686
        %690 = vst.msk [vmem:[%s474 + $0x8] sm:$0xff] %vm688, %v687
        %v691 = vld [vmem:[%s6] sm:$0xff]
        %v692 = vld [vmem:[%s6 + $0x8] sm:$0xff]
        %v693 = vld [vmem:[%s7] sm:$0x1]
        %v695 = vlaneseq
        %v696 = vshrl.u32 %v695, 7
        %v697 = vsub.s32 0, %v696
        %v698 = vrot.slane %v693, %v697
        %v701 = vsel %vm688, %v686, 0
        %v704 = vsel %vm688, %v687, 0
        %706 = vmatprep.subr.mxu0 0.0
        %707 = vmatpush1.msra.mxu0 0.0
        %708 = vmatprep.subr.mxu0 0.0
        %709 = vmatpush1.msra.mxu0 0.0
        %710 = vmatprep.subr.mxu0 0.0
        %711 = vmatpush1.msra.mxu0 0.0
        %712 = vmatprep.subr.mxu0 0.0
        %713 = vmatpush1.msra.mxu0 0.0
        %714 = vmatprep.subr.mxu0 0.0
        %715 = vmatpush1.msra.mxu0 0.0
        %716 = vmatprep.subr.mxu0 0.0
        %717 = vmatpush1.msra.mxu0 0.0
        %718 = vmatprep.subr.mxu0 0.0
        %719 = vmatpush1.msra.mxu0 0.0
        %720 = vmatprep.subr.mxu0 0.0
        %721 = vmatpush1.msra.mxu0 0.0
        %722 = vmatprep.subr.mxu0 0.0
        %723 = vmatpush1.msra.mxu0 0.0
        %724 = vmatprep.subr.mxu0 0.0
        %725 = vmatpush1.msra.mxu0 0.0
        %726 = vmatprep.subr.mxu0 0.0
        %727 = vmatpush1.msra.mxu0 0.0
        %728 = vmatprep.subr.mxu0 0.0
        %729 = vmatpush1.msra.mxu0 0.0
        %730 = vmatprep.subr.mxu0 0.0
        %731 = vmatpush1.msra.mxu0 0.0
        %732 = vmatprep.subr.mxu0 0.0
        %733 = vmatpush1.msra.mxu0 0.0
        %734 = vmatprep.subr.mxu0 0.0
        %735 = vmatpush1.msra.mxu0 %v692
        %736 = vmatprep.subr.mxu0 0.0
        %737 = vmatpush1.msra.mxu0 %v691
        %738 = vmatprep.subr.mxu0 0.0
        %739 = vmatpush2.msra.mxu0 0.0
        %740 = vmatprep.subr.mxu0 0.0
        %741 = vmatpush2.msra.mxu0 0.0
        %742 = vmatprep.subr.mxu0 0.0
        %743 = vmatpush2.msra.mxu0 0.0
        %744 = vmatprep.subr.mxu0 0.0
        %745 = vmatpush2.msra.mxu0 0.0
        %746 = vmatprep.subr.mxu0 0.0
        %747 = vmatpush2.msra.mxu0 0.0
        %748 = vmatprep.subr.mxu0 0.0
        %749 = vmatpush2.msra.mxu0 0.0
        %750 = vmatprep.subr.mxu0 0.0
        %751 = vmatpush2.msra.mxu0 0.0
        %752 = vmatprep.subr.mxu0 0.0
        %753 = vmatpush2.msra.mxu0 0.0
        %754 = vmatprep.subr.mxu0 0.0
        %755 = vmatpush2.msra.mxu0 0.0
        %756 = vmatprep.subr.mxu0 0.0
        %757 = vmatpush2.msra.mxu0 0.0
        %758 = vmatprep.subr.mxu0 0.0
        %759 = vmatpush2.msra.mxu0 0.0
        %760 = vmatprep.subr.mxu0 0.0
        %761 = vmatpush2.msra.mxu0 0.0
        %762 = vmatprep.subr.mxu0 0.0
        %763 = vmatpush2.msra.mxu0 0.0
        %764 = vmatprep.subr.mxu0 0.0
        %765 = vmatpush2.msra.mxu0 0.0
        %766 = vmatprep.subr.mxu0 0.0
        %767 = vmatpush2.msra.mxu0 0.0
        %768 = vmatprep.subr.mxu0 0.0
        %769 = vmatpush2.msra.mxu0 0.0
        %770 = vmatprep.mubr.f32.mxu0 0.0
        %771 = vmatmul.mubr.f32.gmra.mxu0 %v701
        %v772 = vpop.f32.mrf.mxu0
        %v773 = vadd.f32 %v698, %v772
        %v774 = vpop.f32.mrf.mxu0
        %775 = vmatprep.mubr.f32.mxu0 0.0
        %776 = vmatmul.mubr.f32.gmra.mxu0 %v704
        %v777 = vpop.f32.mrf.mxu0
        %v778 = vadd.f32 %v698, %v777
        %v779 = vpop.f32.mrf.mxu0
        %780 = vdwg.mxu0
        %v781 = vtanh.pop %v773
        %v782 = vtanh.pop %v778
        %v783 = vld [vmem:[%s8] sm:$0xff]
        %v784 = vld [vmem:[%s8 + $0x8] sm:$0xff]
        %v785 = vld [vmem:[%s8 + $0x10] sm:$0xff]
        %v786 = vld [vmem:[%s8 + $0x18] sm:$0xff]
        %v787 = vld [vmem:[%s8 + $0x20] sm:$0xff]
        %v788 = vld [vmem:[%s8 + $0x28] sm:$0xff]
        %v789 = vld [vmem:[%s8 + $0x30] sm:$0xff]
        %v790 = vld [vmem:[%s8 + $0x38] sm:$0xff]
        %v791 = vld [vmem:[%s9] sm:$0x1]
        %v793 = vlaneseq
        %v794 = vshrl.u32 %v793, 7
        %v795 = vsub.s32 0, %v794
        %v796 = vrot.slane %v791, %v795
        %v799 = vsel %vm588, %v781, 0
        %v802 = vsel %vm588, %v782, 0
        %804 = vmatprep.subr.mxu0 0.0
        %805 = vmatpush1.msra.mxu0 0.0
        %806 = vmatprep.subr.mxu0 0.0
        %807 = vmatpush1.msra.mxu0 0.0
        %808 = vmatprep.subr.mxu0 0.0
        %809 = vmatpush1.msra.mxu0 0.0
        %810 = vmatprep.subr.mxu0 0.0
        %811 = vmatpush1.msra.mxu0 0.0
        %812 = vmatprep.subr.mxu0 0.0
        %813 = vmatpush1.msra.mxu0 0.0
        %814 = vmatprep.subr.mxu0 0.0
        %815 = vmatpush1.msra.mxu0 0.0
        %816 = vmatprep.subr.mxu0 0.0
        %817 = vmatpush1.msra.mxu0 0.0
        %818 = vmatprep.subr.mxu0 0.0
        %819 = vmatpush1.msra.mxu0 0.0
        %820 = vmatprep.subr.mxu0 0.0
        %821 = vmatpush1.msra.mxu0 %v790
        %822 = vmatprep.subr.mxu0 0.0
        %823 = vmatpush1.msra.mxu0 %v789
        %824 = vmatprep.subr.mxu0 0.0
        %825 = vmatpush1.msra.mxu0 %v788
        %826 = vmatprep.subr.mxu0 0.0
        %827 = vmatpush1.msra.mxu0 %v787
        %828 = vmatprep.subr.mxu0 0.0
        %829 = vmatpush1.msra.mxu0 %v786
        %830 = vmatprep.subr.mxu0 0.0
        %831 = vmatpush1.msra.mxu0 %v785
        %832 = vmatprep.subr.mxu0 0.0
        %833 = vmatpush1.msra.mxu0 %v784
        %834 = vmatprep.subr.mxu0 0.0
        %835 = vmatpush1.msra.mxu0 %v783
        %836 = vmatprep.subr.mxu0 0.0
        %837 = vmatpush2.msra.mxu0 0.0
        %838 = vmatprep.subr.mxu0 0.0
        %839 = vmatpush2.msra.mxu0 0.0
        %840 = vmatprep.subr.mxu0 0.0
        %841 = vmatpush2.msra.mxu0 0.0
        %842 = vmatprep.subr.mxu0 0.0
        %843 = vmatpush2.msra.mxu0 0.0
        %844 = vmatprep.subr.mxu0 0.0
        %845 = vmatpush2.msra.mxu0 0.0
        %846 = vmatprep.subr.mxu0 0.0
        %847 = vmatpush2.msra.mxu0 0.0
        %848 = vmatprep.subr.mxu0 0.0
        %849 = vmatpush2.msra.mxu0 0.0
        %850 = vmatprep.subr.mxu0 0.0
        %851 = vmatpush2.msra.mxu0 0.0
        %852 = vmatprep.subr.mxu0 0.0
        %853 = vmatpush2.msra.mxu0 0.0
        %854 = vmatprep.subr.mxu0 0.0
        %855 = vmatpush2.msra.mxu0 0.0
        %856 = vmatprep.subr.mxu0 0.0
        %857 = vmatpush2.msra.mxu0 0.0
        %858 = vmatprep.subr.mxu0 0.0
        %859 = vmatpush2.msra.mxu0 0.0
        %860 = vmatprep.subr.mxu0 0.0
        %861 = vmatpush2.msra.mxu0 0.0
        %862 = vmatprep.subr.mxu0 0.0
        %863 = vmatpush2.msra.mxu0 0.0
        %864 = vmatprep.subr.mxu0 0.0
        %865 = vmatpush2.msra.mxu0 0.0
        %866 = vmatprep.subr.mxu0 0.0
        %867 = vmatpush2.msra.mxu0 0.0
        %868 = vmatprep.mubr.f32.mxu0 0.0
        %869 = vmatmul.mubr.f32.gmra.mxu0 %v799
        %v870 = vpop.f32.mrf.mxu0
        %v871 = vadd.f32 %v796, %v870
        %v872 = vpop.f32.mrf.mxu0
        %873 = vmatprep.mubr.f32.mxu0 0.0
        %874 = vmatmul.mubr.f32.gmra.mxu0 %v802
        %v875 = vpop.f32.mrf.mxu0
        %v876 = vadd.f32 %v796, %v875
        %v877 = vpop.f32.mrf.mxu0
        %878 = vdwg.mxu0
        %879 = vst.msk [vmem:[%s481] sm:$0xff] %vm498, %v871
        %880 = vst.msk [vmem:[%s481 + $0x8] sm:$0xff] %vm498, %v876
        %s881 = sand.u32 %s258, 1
        %s882 = scalar_lea.sflag [#allocation4], %s881
        %s883 = sand.u32 %s258, 1
        %s884 = smul.addr %s883, 8
        %s885 = scalar_lea.vmem [#allocation3], %s884
        %s886 = sand.u32 %s30, 1
        %s887 = scalar_lea.sflag [#allocation6], %s886
        %s888 = sand.u32 %s284, 1
        %s889 = smul.addr %s888, 16
        %s890 = scalar_lea.vmem [#allocation5], %s889
        %s891 = sand.u32 %s30, 1
        %s892 = scalar_lea.sflag [#allocation6], %s891
        %s893 = sand.u32 %s310, 1
        %s894 = smul.addr %s893, 16
        %s895 = scalar_lea.vmem [#allocation7], %s894
        // Predicated region
        $region99: #{tpu_custom_call.1} parent=93 // pred_check
          %p896 = pneg %p268
        $region100: #{tpu_custom_call.1} parent=93 // pred_check_branch
          %898 = sbr.rel (%p896) target = $region102
        $region101: #{tpu_custom_call.1} parent=93 // pred_region
          %s900 = ssub.s32 128, 128
          %901 = vsyncadd %s882, %s900
          %s902 = smul.addr %s30, 128
          %s903 = scalar_lea.hbm %s10, %s902
          %s905 = sshll.u32 %s885, 4
          %s906 = int_to_ptr.vmem [resolvable:$true] %s905
          %908 = dma.vmem_to_hbm [thread:$0]  %s906, 128, %s903, %s882
        $region102: #{tpu_custom_call.1} parent=93 // pred_fallthru
          _
        // Predicated region
        $region103: #{tpu_custom_call.1} parent=93 // pred_check
          %p909 = pneg %p294
        $region104: #{tpu_custom_call.1} parent=93 // pred_check_branch
          %911 = sbr.rel (%p909) target = $region106
        $region105: #{tpu_custom_call.1} parent=93 // pred_region
          %s913 = ssub.s32 256, 256
          %914 = vsyncadd %s887, %s913
          %s915 = smul.addr %s30, 128
          %s916 = scalar_lea.hbm %s11, %s915
          %s917 = sshll.u32 %s890, 4
          %s918 = int_to_ptr.vmem [resolvable:$true] %s917
          %923 = dma.vmem_to_hbm [thread:$0]  %s918, 256, %s916, %s887, 128, 256, 8
        $region106: #{tpu_custom_call.1} parent=93 // pred_fallthru
          _
        // Predicated region
        $region107: #{tpu_custom_call.1} parent=93 // pred_check
          %p924 = pneg %p320
        $region108: #{tpu_custom_call.1} parent=93 // pred_check_branch
          %926 = sbr.rel (%p924) target = $region110
        $region109: #{tpu_custom_call.1} parent=93 // pred_region
          %s928 = ssub.s32 256, 256
          %929 = vsyncadd %s892, %s928
          %s930 = smul.addr %s30, 128
          %s931 = scalar_lea.hbm %s12, %s930
          %s932 = sshll.u32 %s895, 4
          %s933 = int_to_ptr.vmem [resolvable:$true] %s932
          %938 = dma.vmem_to_hbm [thread:$0]  %s933, 256, %s931, %s892, 128, 256, 8
        $region110: #{tpu_custom_call.1} parent=93 // pred_fallthru
          _
      $region94: #{tpu_custom_call.1} parent=5 // pred_fallthru
        _
      %p939 = scmp.le.s32.totalorder 2, %s25
      // Predicated region
      $region111: #{tpu_custom_call.1} parent=5 // pred_check
        %p940 = pneg %p939
      $region112: #{tpu_custom_call.1} parent=5 // pred_check_branch
        %942 = sbr.rel (%p940) target = $region114
      $region113: #{tpu_custom_call.1} parent=5 // pred_region
        %s943 = ssub.s32 %s25, 2
        // Predicated region
        $region115: #{tpu_custom_call.1} parent=113 // pred_check
          %p944 = pneg %p274
        $region116: #{tpu_custom_call.1} parent=113 // pred_check_branch
          %946 = sbr.rel (%p944) target = $region118
        $region117: #{tpu_custom_call.1} parent=113 // pred_region
          %s947 = sand.u32 %s259, 1
          %s948 = scalar_lea.sflag [#allocation4], %s947
          %s949 = sand.u32 %s259, 1
          %s950 = smul.addr %s949, 8
          %s951 = scalar_lea.vmem [#allocation3], %s950
          %952 = dma.done %s948, 128
        $region118: #{tpu_custom_call.1} parent=113 // pred_fallthru
          _
        // Predicated region
        $region119: #{tpu_custom_call.1} parent=113 // pred_check
          %p953 = pneg %p300
        $region120: #{tpu_custom_call.1} parent=113 // pred_check_branch
          %955 = sbr.rel (%p953) target = $region122
        $region121: #{tpu_custom_call.1} parent=113 // pred_region
          %s956 = sand.u32 %s31, 1
          %s957 = scalar_lea.sflag [#allocation6], %s956
          %s958 = sand.u32 %s285, 1
          %s959 = smul.addr %s958, 16
          %s960 = scalar_lea.vmem [#allocation5], %s959
          %961 = dma.done %s957, 256
        $region122: #{tpu_custom_call.1} parent=113 // pred_fallthru
          _
        // Predicated region
        $region123: #{tpu_custom_call.1} parent=113 // pred_check
          %p962 = pneg %p326
        $region124: #{tpu_custom_call.1} parent=113 // pred_check_branch
          %964 = sbr.rel (%p962) target = $region126
        $region125: #{tpu_custom_call.1} parent=113 // pred_region
          %s965 = sand.u32 %s31, 1
          %s966 = scalar_lea.sflag [#allocation6], %s965
          %s967 = sand.u32 %s311, 1
          %s968 = smul.addr %s967, 16
          %s969 = scalar_lea.vmem [#allocation7], %s968
          %970 = dma.done %s966, 256
        $region126: #{tpu_custom_call.1} parent=113 // pred_fallthru
          _
      $region114: #{tpu_custom_call.1} parent=5 // pred_fallthru
        _
    $region6: #{tpu_custom_call.1} parent=1 // loop_footer
      %s29 = sadd.s32 1, %s25
    $region7: #{tpu_custom_call.1} parent=1 // loop_footer_branch
      %24 = sbr.rel target = $region3
    $region8: #{tpu_custom_call.1} parent=1 // loop_exit
      _
    %971 = vsyncpa [#allocation4], 1
    %s972 = scalar_lea.sflag [#allocation4], 1
    %973 = vsyncpa %s972, 1
    %974 = vsyncpa [#allocation6], 1
    %s975 = scalar_lea.sflag [#allocation6], 1
    %976 = vsyncpa %s975, 1

</llo_original>
